<compile_context>
chip_gen: v7x
topology: tpu7x:2x2x1
jax: 0.10.0
libtpu: 0.0.40
codegen_flags: <defaults>
</compile_context>

<pallas_src>
import jax
import jax.numpy as jnp
from jax.experimental import pallas as pl
from jax.experimental.pallas import tpu as pltpu


N_OUT = 6          # real output features of the last Linear
N_OUT_PAD = 8      # padded output width (sublane-friendly, 16x less writeback than 128)
H1_PAD = 128       # fc1 hidden width padded 24 -> 128 (lane-dense)
H2_PAD = 128       # fc2 hidden width padded 32 -> 128 (lane-dense)
TILE_B_CAP = 8192  # max batch rows per grid step


def _round_up(x, m):
    return ((x + m - 1) // m) * m


def _dqn_kernel(x_ref, w1_ref, b1_ref, w2_ref, b2_ref, w3_ref, b3_ref, o_ref):
    # x streamed per batch tile; cast to the compute dtype inside the kernel
    # (no wrapper-side cast => no extra HBM pass over x).
    x = x_ref[...].astype(w1_ref.dtype)                    # (TILE_B, D)

    # fc1 + ReLU  (f32 accumulation on the MXU, bias/ReLU in f32 on the VPU)
    h1 = jnp.dot(x, w1_ref[...], preferred_element_type=jnp.float32) + b1_ref[...]
    h1 = jnp.maximum(h1, 0.0)                              # (TILE_B, 128) lane-dense

    # fc2 + ReLU
    h2 = jnp.dot(h1.astype(w2_ref.dtype), w2_ref[...],
                 preferred_element_type=jnp.float32) + b2_ref[...]
    h2 = jnp.maximum(h2, 0.0)                              # (TILE_B, 128) lane-dense

    # out (padded to 8 lanes; extra 2 columns are zero and sliced off outside)
    o = jnp.dot(h2.astype(w3_ref.dtype), w3_ref[...],
                preferred_element_type=jnp.float32) + b3_ref[...]
    o_ref[...] = o.astype(o_ref.dtype)                     # (TILE_B, 8)


def _pad_params(params, compute_dtype):
    """Zero-pad hidden/output widths so every intermediate is lane-dense.
    Padded bias lanes stay exactly 0, so ReLU(0+0)=0 propagates zeros and the
    real outputs are bit-identical to the unpadded math (in f32)."""
    w1, b1, w2, b2, w3, b3 = params
    D = w1.shape[0]

    w1p = jnp.zeros((D, H1_PAD), jnp.float32).at[:, :w1.shape[1]].set(w1)
    b1p = jnp.zeros((1, H1_PAD), jnp.float32).at[:, :b1.shape[1]].set(b1)
    w2p = jnp.zeros((H1_PAD, H2_PAD), jnp.float32).at[:w2.shape[0], :w2.shape[1]].set(w2)
    b2p = jnp.zeros((1, H2_PAD), jnp.float32).at[:, :b2.shape[1]].set(b2)
    w3p = jnp.zeros((H2_PAD, N_OUT_PAD), jnp.float32).at[:w3.shape[0], :w3.shape[1]].set(w3)
    b3p = jnp.zeros((1, N_OUT_PAD), jnp.float32).at[:, :b3.shape[1]].set(b3)

    # Only the (tiny) weights take the compute dtype; biases stay f32 so the
    # bias-add + ReLU run in f32 after the f32-accumulating dot.
    return (w1p.astype(compute_dtype), b1p,
            w2p.astype(compute_dtype), b2p,
            w3p.astype(compute_dtype), b3p)


def _pick_tile_b(B):
    if B <= 1024:
        # Single exact block: no batch padding, no partial blocks.
        return B
    # >=2 grid steps so the "parallel" axis can shard across v7x's 2 TCs;
    # cap at 8192 rows (x tile + 8-wide out, double-buffered, is < 5 MiB VMEM).
    return min(TILE_B_CAP, _round_up(pl.cdiv(B, 2), 128))


def dqn_forward(t, params, *, compute_dtype=jnp.float32, tile_b=None):
    """t: (B, n_vertices, n_vertices) -> (B, 6) float32.

    compute_dtype=jnp.bfloat16 streams weights (and, if t is already bf16, x)
    through the MXU in bf16 with f32 accumulation; helps every generation's
    HBM bandwidth, most of all v5e."""
    B = t.shape[0]
    x = t.reshape(B, -1)                                   # flatten(start_dim=1)
    D = x.shape[1]

    w1c, b1c, w2c, b2c, w3c, b3c = _pad_params(params, compute_dtype)

    if tile_b is None:
        tile_b = _pick_tile_b(B)
    grid = (pl.cdiv(B, tile_b),)                           # last block may overhang;
                                                           # OOB rows never hit the output

    out = pl.pallas_call(
        _dqn_kernel,
        out_shape=jax.ShapeDtypeStruct((B, N_OUT_PAD), jnp.float32),
        grid=grid,
        in_specs=[
            pl.BlockSpec((tile_b, D), lambda i: (i, 0)),        # x: streamed per tile
            pl.BlockSpec(w1c.shape, lambda i: (0, 0)),          # weights/biases:
            pl.BlockSpec(b1c.shape, lambda i: (0, 0)),          #   VMEM-resident,
            pl.BlockSpec(w2c.shape, lambda i: (0, 0)),          #   same block every
            pl.BlockSpec(b2c.shape, lambda i: (0, 0)),          #   grid step
            pl.BlockSpec(w3c.shape, lambda i: (0, 0)),
            pl.BlockSpec(b3c.shape, lambda i: (0, 0)),
        ],
        out_specs=pl.BlockSpec((tile_b, N_OUT_PAD), lambda i: (i, 0)),
        compiler_params=pltpu.CompilerParams(
            dimension_semantics=("parallel",),                  # megacore / 2-TC sharding
        ),
    )(x, w1c, b1c, w2c, b2c, w3c, b3c)

    return out[:, :N_OUT]                                  # (B, 8) -> (B, 6): tiny copy


def init_params(key, n_vertices):
    """Deterministic init mimicking torch.nn.Linear (uniform +/- 1/sqrt(fan_in)).
    Weights stored as (in_features, out_features); biases as (1, out_features)."""
    d_in = n_vertices * n_vertices
    dims = [(d_in, 24), (24, 32), (32, N_OUT)]
    params = []
    for (fi, fo) in dims:
        key, kw, kb = jax.random.split(key, 3)
        bound = 1.0 / (fi ** 0.5)
        w = jax.random.uniform(kw, (fi, fo), jnp.float32, -bound, bound)
        b = jax.random.uniform(kb, (1, fo), jnp.float32, -bound, bound)
        params += [w, b]
    return tuple(params)


def _reference(t, params):
    # pure-JAX reference for sanity check
    w1, b1, w2, b2, w3, b3 = params
    x = t.reshape(t.shape[0], -1)
    h1 = jnp.maximum(x @ w1 + b1, 0.0)
    h2 = jnp.maximum(h1 @ w2 + b2, 0.0)
    return h2 @ w3 + b3


if __name__ == "__main__":
    n_vertices = 8        # -> in_features = 64
    batch = 2             # exercises the small-batch exact-block path

    key = jax.random.PRNGKey(0)
    key, k_in = jax.random.split(key)
    t = jax.random.normal(k_in, (batch, n_vertices, n_vertices), jnp.float32)
    params = init_params(key, n_vertices)

    ref = _reference(t, params)

    # f32 path (exact vs reference)
    out = dqn_forward(t, params)
    out = jax.block_until_ready(out)
    assert out.shape == (batch, N_OUT), out.shape
    assert jnp.allclose(out, ref, atol=1e-5, rtol=1e-5), "f32 mismatch vs reference"

    # bf16 weight-streaming path (loose tolerance); x stays f32 here, cast in-kernel
    out_bf16 = dqn_forward(t, params, compute_dtype=jnp.bfloat16)
    out_bf16 = jax.block_until_ready(out_bf16)
    assert jnp.allclose(out_bf16, ref, atol=5e-2, rtol=5e-2), "bf16 mismatch vs reference"

    # larger, non-multiple batch to exercise multi-step grid + overhanging last block
    key, k_big = jax.random.split(key)
    t_big = jax.random.normal(k_big, (1000, n_vertices, n_vertices), jnp.float32)
    out_big = jax.block_until_ready(dqn_forward(t_big, params, tile_b=384))
    assert out_big.shape == (1000, N_OUT)
    assert jnp.allclose(out_big, _reference(t_big, params), atol=1e-5, rtol=1e-5), \
        "multi-tile mismatch vs reference"

    print("KERNEL_OK")
</pallas_src>

<mosaic_0001>
module attributes {stable_mosaic.version = 11 : i64} {
  func.func @_dqn_kernel(%arg0: i32, %arg1: memref<2x64xf32, #tpu.memory_space<vmem>>, %arg2: memref<64x128xf32, #tpu.memory_space<vmem>>, %arg3: memref<1x128xf32, #tpu.memory_space<vmem>>, %arg4: memref<128x128xf32, #tpu.memory_space<vmem>>, %arg5: memref<1x128xf32, #tpu.memory_space<vmem>>, %arg6: memref<128x8xf32, #tpu.memory_space<vmem>>, %arg7: memref<1x8xf32, #tpu.memory_space<vmem>>, %arg8: memref<2x8xf32, #tpu.memory_space<vmem>>) attributes {dimension_semantics = [#tpu.dimension_semantics<parallel>], iteration_bounds = array<i64: 1>, scalar_prefetch = 0 : i64, scratch_operands = 0 : i64, tpu.core_type = #tpu.core_type<tc>, window_params = [{transform_indices = @transform_0, window_bounds = array<i64: 2, 64>}, {pipeline_mode = #tpu.pipeline_mode<synchronous>, transform_indices = @transform_1, window_bounds = array<i64: 64, 128>}, {pipeline_mode = #tpu.pipeline_mode<synchronous>, transform_indices = @transform_2, window_bounds = array<i64: 1, 128>}, {pipeline_mode = #tpu.pipeline_mode<synchronous>, transform_indices = @transform_3, window_bounds = array<i64: 128, 128>}, {pipeline_mode = #tpu.pipeline_mode<synchronous>, transform_indices = @transform_4, window_bounds = array<i64: 1, 128>}, {pipeline_mode = #tpu.pipeline_mode<synchronous>, transform_indices = @transform_5, window_bounds = array<i64: 128, 8>}, {pipeline_mode = #tpu.pipeline_mode<synchronous>, transform_indices = @transform_6, window_bounds = array<i64: 1, 8>}, {transform_indices = @transform_7, window_bounds = array<i64: 2, 8>}]} {
    %c0 = arith.constant 0 : index
    %c0_0 = arith.constant 0 : index
    %0 = vector.load %arg1[%c0, %c0_0] : memref<2x64xf32, #tpu.memory_space<vmem>>, vector<2x64xf32>
    %c0_1 = arith.constant 0 : index
    %c0_2 = arith.constant 0 : index
    %1 = vector.load %arg2[%c0_1, %c0_2] : memref<64x128xf32, #tpu.memory_space<vmem>>, vector<64x128xf32>
    %cst = arith.constant dense<0.000000e+00> : vector<2x128xf32>
    %2 = tpu.matmul %0, %1, %cst {dimension_numbers = #tpu.dot_dimension_numbers<[1], [0], [0], [1], [0, 0, 1, 1], [], []>} : vector<2x64xf32>, vector<64x128xf32>, vector<2x128xf32> -> vector<2x128xf32>
    %c0_3 = arith.constant 0 : index
    %c0_4 = arith.constant 0 : index
    %3 = vector.load %arg3[%c0_3, %c0_4] : memref<1x128xf32, #tpu.memory_space<vmem>>, vector<1x128xf32>
    %4 = vector.broadcast %3 : vector<1x128xf32> to vector<2x128xf32>
    %5 = arith.addf %2, %4 : vector<2x128xf32>
    %cst_5 = arith.constant 0.000000e+00 : f32
    %6 = vector.broadcast %cst_5 : f32 to vector<2x128xf32>
    %7 = arith.maximumf %5, %6 : vector<2x128xf32>
    %c0_6 = arith.constant 0 : index
    %c0_7 = arith.constant 0 : index
    %8 = vector.load %arg4[%c0_6, %c0_7] : memref<128x128xf32, #tpu.memory_space<vmem>>, vector<128x128xf32>
    %cst_8 = arith.constant dense<0.000000e+00> : vector<2x128xf32>
    %9 = tpu.matmul %7, %8, %cst_8 {dimension_numbers = #tpu.dot_dimension_numbers<[1], [0], [0], [1], [0, 0, 1, 1], [], []>} : vector<2x128xf32>, vector<128x128xf32>, vector<2x128xf32> -> vector<2x128xf32>
    %c0_9 = arith.constant 0 : index
    %c0_10 = arith.constant 0 : index
    %10 = vector.load %arg5[%c0_9, %c0_10] : memref<1x128xf32, #tpu.memory_space<vmem>>, vector<1x128xf32>
    %11 = vector.broadcast %10 : vector<1x128xf32> to vector<2x128xf32>
    %12 = arith.addf %9, %11 : vector<2x128xf32>
    %cst_11 = arith.constant 0.000000e+00 : f32
    %13 = vector.broadcast %cst_11 : f32 to vector<2x128xf32>
    %14 = arith.maximumf %12, %13 : vector<2x128xf32>
    %c0_12 = arith.constant 0 : index
    %c0_13 = arith.constant 0 : index
    %15 = vector.load %arg6[%c0_12, %c0_13] : memref<128x8xf32, #tpu.memory_space<vmem>>, vector<128x8xf32>
    %cst_14 = arith.constant dense<0.000000e+00> : vector<2x8xf32>
    %16 = tpu.matmul %14, %15, %cst_14 {dimension_numbers = #tpu.dot_dimension_numbers<[1], [0], [0], [1], [0, 0, 1, 1], [], []>} : vector<2x128xf32>, vector<128x8xf32>, vector<2x8xf32> -> vector<2x8xf32>
    %c0_15 = arith.constant 0 : index
    %c0_16 = arith.constant 0 : index
    %17 = vector.load %arg7[%c0_15, %c0_16] : memref<1x8xf32, #tpu.memory_space<vmem>>, vector<1x8xf32>
    %18 = vector.broadcast %17 : vector<1x8xf32> to vector<2x8xf32>
    %19 = arith.addf %16, %18 : vector<2x8xf32>
    %c0_17 = arith.constant 0 : index
    %c0_18 = arith.constant 0 : index
    %20 = vector.load %arg8[%c0_17, %c0_18] : memref<2x8xf32, #tpu.memory_space<vmem>>, vector<2x8xf32>
    tpu.vector_store %arg8[%c0_17, %c0_18], %19 {strides = array<i32>} : memref<2x8xf32, #tpu.memory_space<vmem>>, vector<2x8xf32>,
    return
  }
  func.func @transform_0(%arg0: i32) -> (i32, i32) {
    %c0_i32 = arith.constant 0 : i32
    %c0_i32_0 = arith.constant 0 : i32
    return %arg0, %c0_i32 : i32, i32
  }
  func.func @transform_1(%arg0: i32) -> (i32, i32) {
    %c0_i32 = arith.constant 0 : i32
    %c0_i32_0 = arith.constant 0 : i32
    %c0_i32_1 = arith.constant 0 : i32
    return %c0_i32, %c0_i32_0 : i32, i32
  }
  func.func @transform_2(%arg0: i32) -> (i32, i32) {
    %c0_i32 = arith.constant 0 : i32
    %c0_i32_0 = arith.constant 0 : i32
    %c0_i32_1 = arith.constant 0 : i32
    return %c0_i32, %c0_i32_0 : i32, i32
  }
  func.func @transform_3(%arg0: i32) -> (i32, i32) {
    %c0_i32 = arith.constant 0 : i32
    %c0_i32_0 = arith.constant 0 : i32
    %c0_i32_1 = arith.constant 0 : i32
    return %c0_i32, %c0_i32_0 : i32, i32
  }
  func.func @transform_4(%arg0: i32) -> (i32, i32) {
    %c0_i32 = arith.constant 0 : i32
    %c0_i32_0 = arith.constant 0 : i32
    %c0_i32_1 = arith.constant 0 : i32
    return %c0_i32, %c0_i32_0 : i32, i32
  }
  func.func @transform_5(%arg0: i32) -> (i32, i32) {
    %c0_i32 = arith.constant 0 : i32
    %c0_i32_0 = arith.constant 0 : i32
    %c0_i32_1 = arith.constant 0 : i32
    return %c0_i32, %c0_i32_0 : i32, i32
  }
  func.func @transform_6(%arg0: i32) -> (i32, i32) {
    %c0_i32 = arith.constant 0 : i32
    %c0_i32_0 = arith.constant 0 : i32
    %c0_i32_1 = arith.constant 0 : i32
    return %c0_i32, %c0_i32_0 : i32, i32
  }
  func.func @transform_7(%arg0: i32) -> (i32, i32) {
    %c0_i32 = arith.constant 0 : i32
    %c0_i32_0 = arith.constant 0 : i32
    return %arg0, %c0_i32 : i32, i32
  }
}

</mosaic_0001>

<llo_original>
// kernel: tpu_custom_call.1
$region0: #{tpu_custom_call.1}
  #allocation0 [shape = 'u32[]', space=smem, size = 0x4, offset = 0x4, fixed_abs, tag = 'smem constant byte address 0x4 - core index']
  #allocation1 [shape = 'u32[144,128]{1,0:T(1,128)}', space=vmem, size = 0x12000, scoped, tag = 'internal scratch']
  %s0 = inlined_call_operand.vmem [shape: f32[2,64], index: 0, kind: input, shape index: {}]
  %s1 = inlined_call_operand.hbm [shape: f32[64,128], index: 1, kind: input, shape index: {}]
  %s2 = inlined_call_operand.vmem [shape: f32[1,128], index: 2, kind: input, shape index: {}]
  %s3 = inlined_call_operand.vmem [shape: f32[128,128], index: 3, kind: input, shape index: {}]
  %s4 = inlined_call_operand.vmem [shape: f32[1,128], index: 4, kind: input, shape index: {}]
  %s5 = inlined_call_operand.vmem [shape: f32[128,8], index: 5, kind: input, shape index: {}]
  %s6 = inlined_call_operand.vmem [shape: f32[1,8], index: 6, kind: input, shape index: {}]
  %s7 = inlined_call_operand.hbm [shape: f32[2,8], index: 7, kind: output, shape index: {}]
  %s8 = sld [smem:[#allocation0]]
  $region42: #{tpu_custom_call.1} parent=0
    _
  %s10 = ssub.s32 1, %s8
  %s11 = scalar_select 0, %s10, %s8
  $region1: #{tpu_custom_call.1} parent=0
    #allocation2 [shape = 'u8[32768]{0}', space=vmem, size = 0x8000, scoped, tag = 'input window, operand 1, single buffered']
    #allocation3 [shape = 's32[1]{0}', space=sflag, size = 0x4, scoped, tag = 'scoped memory for tpu_custom_call.1']
    #allocation4 [shape = 's32[1]{0}', space=sflag, size = 0x4, scoped, tag = 'scoped memory for tpu_custom_call.1']
    #allocation5 [shape = 'u8[1024]{0}', space=vmem, size = 0x400, scoped, tag = 'output window, operand 0, single buffered']
    %12 = vsyncpa [#allocation3], 0
    %13 = vsyncpa [#allocation4], 0
    // Predicated region
    $region2: #{tpu_custom_call.1} parent=1 // pred_check
      _
    $region3: #{tpu_custom_call.1} parent=1 // pred_check_branch
      %15 = sbr.rel (0) target = $region5
    $region4: #{tpu_custom_call.1} parent=1 // pred_region
      _
    $region5: #{tpu_custom_call.1} parent=1 // pred_fallthru
      _
    // Predicated region
    $region6: #{tpu_custom_call.1} parent=1 // pred_check
      _
    $region7: #{tpu_custom_call.1} parent=1 // pred_check_branch
      %17 = sbr.rel (0) target = $region9
    $region8: #{tpu_custom_call.1} parent=1 // pred_region
      %s19 = ssub.s32 1024, 1024
      %20 = vsyncadd [#allocation3], %s19
      %s21 = sshll.u32 [#allocation2], 4
      %s22 = int_to_ptr.vmem [resolvable:$true] %s21
      %27 = dma.hbm_to_vmem [thread:$0]  %s1, 1024, %s22, [#allocation3], 128, 128, 8
    $region9: #{tpu_custom_call.1} parent=1 // pred_fallthru
      _
    // Predicated region
    $region10: #{tpu_custom_call.1} parent=1 // pred_check
      _
    $region11: #{tpu_custom_call.1} parent=1 // pred_check_branch
      %29 = sbr.rel (0) target = $region13
    $region12: #{tpu_custom_call.1} parent=1 // pred_region
      _
    $region13: #{tpu_custom_call.1} parent=1 // pred_fallthru
      _
    // Predicated region
    $region14: #{tpu_custom_call.1} parent=1 // pred_check
      _
    $region15: #{tpu_custom_call.1} parent=1 // pred_check_branch
      %31 = sbr.rel (0) target = $region17
    $region16: #{tpu_custom_call.1} parent=1 // pred_region
      _
    $region17: #{tpu_custom_call.1} parent=1 // pred_fallthru
      _
    // Predicated region
    $region18: #{tpu_custom_call.1} parent=1 // pred_check
      _
    $region19: #{tpu_custom_call.1} parent=1 // pred_check_branch
      %33 = sbr.rel (0) target = $region21
    $region20: #{tpu_custom_call.1} parent=1 // pred_region
      _
    $region21: #{tpu_custom_call.1} parent=1 // pred_fallthru
      _
    // Predicated region
    $region22: #{tpu_custom_call.1} parent=1 // pred_check
      _
    $region23: #{tpu_custom_call.1} parent=1 // pred_check_branch
      %35 = sbr.rel (0) target = $region25
    $region24: #{tpu_custom_call.1} parent=1 // pred_region
      _
    $region25: #{tpu_custom_call.1} parent=1 // pred_fallthru
      _
    // Predicated region
    $region26: #{tpu_custom_call.1} parent=1 // pred_check
      _
    $region27: #{tpu_custom_call.1} parent=1 // pred_check_branch
      %37 = sbr.rel (0) target = $region29
    $region28: #{tpu_custom_call.1} parent=1 // pred_region
      _
    $region29: #{tpu_custom_call.1} parent=1 // pred_fallthru
      _
    // Predicated region
    $region30: #{tpu_custom_call.1} parent=1 // pred_check
      _
    $region31: #{tpu_custom_call.1} parent=1 // pred_check_branch
      %39 = sbr.rel (0) target = $region33
    $region32: #{tpu_custom_call.1} parent=1 // pred_region
      %40 = dma.done [#allocation3], 1024
    $region33: #{tpu_custom_call.1} parent=1 // pred_fallthru
      _
    %v41 = vld [vmem:[%s0] sm:$0x3]
    %v42 = vld [vmem:[#allocation2] sm:$0xff]
    %v43 = vld [vmem:[#allocation2 + $0x8] sm:$0xff]
    %v44 = vld [vmem:[#allocation2 + $0x10] sm:$0xff]
    %v45 = vld [vmem:[#allocation2 + $0x18] sm:$0xff]
    %v46 = vld [vmem:[#allocation2 + $0x20] sm:$0xff]
    %v47 = vld [vmem:[#allocation2 + $0x28] sm:$0xff]
    %v48 = vld [vmem:[#allocation2 + $0x30] sm:$0xff]
    %v49 = vld [vmem:[#allocation2 + $0x38] sm:$0xff]
    %v50 = vld [vmem:[%s2] sm:$0x1]
    %v52 = vlaneseq
    %v53 = vshrl.u32 %v52, 7
    %v54 = vsub.s32 0, %v53
    %v55 = vrot.slane %v50, %v54
    %vm57 = vcmask 523264
    %v59 = vsel %vm57, %v41, 0
    %61 = vmatprep.subr.mxu0 0.0
    %62 = vmatpush1.msra.mxu0 %v42
    %63 = vmatprep.subr.mxu0 0.0
    %64 = vmatpush1.msra.mxu0 %v43
    %65 = vmatprep.subr.mxu0 0.0
    %66 = vmatpush1.msra.mxu0 %v44
    %67 = vmatprep.subr.mxu0 0.0
    %68 = vmatpush1.msra.mxu0 %v45
    %69 = vmatprep.subr.mxu0 0.0
    %70 = vmatpush1.msra.mxu0 %v46
    %71 = vmatprep.subr.mxu0 0.0
    %72 = vmatpush1.msra.mxu0 %v47
    %73 = vmatprep.subr.mxu0 0.0
    %74 = vmatpush1.msra.mxu0 %v48
    %75 = vmatprep.subr.mxu0 0.0
    %76 = vmatpush1.msra.mxu0 %v49
    %77 = vmatprep.subr.mxu0 0.0
    %78 = vmatpush1.msra.mxu0 0.0
    %79 = vmatprep.subr.mxu0 0.0
    %80 = vmatpush1.msra.mxu0 0.0
    %81 = vmatprep.subr.mxu0 0.0
    %82 = vmatpush1.msra.mxu0 0.0
    %83 = vmatprep.subr.mxu0 0.0
    %84 = vmatpush1.msra.mxu0 0.0
    %85 = vmatprep.subr.mxu0 0.0
    %86 = vmatpush1.msra.mxu0 0.0
    %87 = vmatprep.subr.mxu0 0.0
    %88 = vmatpush1.msra.mxu0 0.0
    %89 = vmatprep.subr.mxu0 0.0
    %90 = vmatpush1.msra.mxu0 0.0
    %91 = vmatprep.subr.mxu0 0.0
    %92 = vmatpush1.msra.mxu0 0.0
    %93 = vmatprep.subr.mxu0 0.0
    %94 = vmatpush1.msra.mxu0 0.0
    %95 = vmatprep.subr.mxu0 0.0
    %96 = vmatpush1.msra.mxu0 0.0
    %97 = vmatprep.subr.mxu0 0.0
    %98 = vmatpush1.msra.mxu0 0.0
    %99 = vmatprep.subr.mxu0 0.0
    %100 = vmatpush1.msra.mxu0 0.0
    %101 = vmatprep.subr.mxu0 0.0
    %102 = vmatpush1.msra.mxu0 0.0
    %103 = vmatprep.subr.mxu0 0.0
    %104 = vmatpush1.msra.mxu0 0.0
    %105 = vmatprep.subr.mxu0 0.0
    %106 = vmatpush1.msra.mxu0 0.0
    %107 = vmatprep.subr.mxu0 0.0
    %108 = vmatpush1.msra.mxu0 0.0
    %109 = vmatprep.subr.mxu0 0.0
    %110 = vmatpush1.msra.mxu0 0.0
    %111 = vmatprep.subr.mxu0 0.0
    %112 = vmatpush1.msra.mxu0 0.0
    %113 = vmatprep.subr.mxu0 0.0
    %114 = vmatpush1.msra.mxu0 0.0
    %115 = vmatprep.subr.mxu0 0.0
    %116 = vmatpush1.msra.mxu0 0.0
    %117 = vmatprep.subr.mxu0 0.0
    %118 = vmatpush1.msra.mxu0 0.0
    %119 = vmatprep.subr.mxu0 0.0
    %120 = vmatpush1.msra.mxu0 0.0
    %121 = vmatprep.subr.mxu0 0.0
    %122 = vmatpush1.msra.mxu0 0.0
    %123 = vmatprep.subr.mxu0 0.0
    %124 = vmatpush1.msra.mxu0 0.0
    %125 = vmatprep.mubr.f32.mxu0 0.0
    %126 = vmatmul.mubr.f32.gmra.mrb[0].mxu0 %v59
    %v127 = vpop.f32.mrb[0].mxu0
    %v128 = vadd.f32 %v55, %v127
    %v129 = vpop.f32.mrb[0].mxu0
    %130 = vdwg.mxu0
    %v131 = vmax.f32 %v128, 0.0
    %v132 = vld [vmem:[%s3] sm:$0xff]
    %v133 = vld [vmem:[%s3 + $0x8] sm:$0xff]
    %v134 = vld [vmem:[%s3 + $0x10] sm:$0xff]
    %v135 = vld [vmem:[%s3 + $0x18] sm:$0xff]
    %v136 = vld [vmem:[%s3 + $0x20] sm:$0xff]
    %v137 = vld [vmem:[%s3 + $0x28] sm:$0xff]
    %v138 = vld [vmem:[%s3 + $0x30] sm:$0xff]
    %v139 = vld [vmem:[%s3 + $0x38] sm:$0xff]
    %v140 = vld [vmem:[%s3 + $0x40] sm:$0xff]
    %v141 = vld [vmem:[%s3 + $0x48] sm:$0xff]
    %v142 = vld [vmem:[%s3 + $0x50] sm:$0xff]
    %v143 = vld [vmem:[%s3 + $0x58] sm:$0xff]
    %v144 = vld [vmem:[%s3 + $0x60] sm:$0xff]
    %v145 = vld [vmem:[%s3 + $0x68] sm:$0xff]
    %v146 = vld [vmem:[%s3 + $0x70] sm:$0xff]
    %v147 = vld [vmem:[%s3 + $0x78] sm:$0xff]
    %v148 = vld [vmem:[%s4] sm:$0x1]
    %v150 = vlaneseq
    %v151 = vshrl.u32 %v150, 7
    %v152 = vsub.s32 0, %v151
    %v153 = vrot.slane %v148, %v152
    %155 = vmatprep.subr.mxu0 0.0
    %156 = vmatpush1.msra.mxu0 %v132
    %157 = vmatprep.subr.mxu0 0.0
    %158 = vmatpush1.msra.mxu0 %v133
    %159 = vmatprep.subr.mxu0 0.0
    %160 = vmatpush1.msra.mxu0 %v134
    %161 = vmatprep.subr.mxu0 0.0
    %162 = vmatpush1.msra.mxu0 %v135
    %163 = vmatprep.subr.mxu0 0.0
    %164 = vmatpush1.msra.mxu0 %v136
    %165 = vmatprep.subr.mxu0 0.0
    %166 = vmatpush1.msra.mxu0 %v137
    %167 = vmatprep.subr.mxu0 0.0
    %168 = vmatpush1.msra.mxu0 %v138
    %169 = vmatprep.subr.mxu0 0.0
    %170 = vmatpush1.msra.mxu0 %v139
    %171 = vmatprep.subr.mxu0 0.0
    %172 = vmatpush1.msra.mxu0 %v140
    %173 = vmatprep.subr.mxu0 0.0
    %174 = vmatpush1.msra.mxu0 %v141
    %175 = vmatprep.subr.mxu0 0.0
    %176 = vmatpush1.msra.mxu0 %v142
    %177 = vmatprep.subr.mxu0 0.0
    %178 = vmatpush1.msra.mxu0 %v143
    %179 = vmatprep.subr.mxu0 0.0
    %180 = vmatpush1.msra.mxu0 %v144
    %181 = vmatprep.subr.mxu0 0.0
    %182 = vmatpush1.msra.mxu0 %v145
    %183 = vmatprep.subr.mxu0 0.0
    %184 = vmatpush1.msra.mxu0 %v146
    %185 = vmatprep.subr.mxu0 0.0
    %186 = vmatpush1.msra.mxu0 %v147
    %187 = vmatprep.subr.mxu0 0.0
    %188 = vmatpush1.msra.mxu0 0.0
    %189 = vmatprep.subr.mxu0 0.0
    %190 = vmatpush1.msra.mxu0 0.0
    %191 = vmatprep.subr.mxu0 0.0
    %192 = vmatpush1.msra.mxu0 0.0
    %193 = vmatprep.subr.mxu0 0.0
    %194 = vmatpush1.msra.mxu0 0.0
    %195 = vmatprep.subr.mxu0 0.0
    %196 = vmatpush1.msra.mxu0 0.0
    %197 = vmatprep.subr.mxu0 0.0
    %198 = vmatpush1.msra.mxu0 0.0
    %199 = vmatprep.subr.mxu0 0.0
    %200 = vmatpush1.msra.mxu0 0.0
    %201 = vmatprep.subr.mxu0 0.0
    %202 = vmatpush1.msra.mxu0 0.0
    %203 = vmatprep.subr.mxu0 0.0
    %204 = vmatpush1.msra.mxu0 0.0
    %205 = vmatprep.subr.mxu0 0.0
    %206 = vmatpush1.msra.mxu0 0.0
    %207 = vmatprep.subr.mxu0 0.0
    %208 = vmatpush1.msra.mxu0 0.0
    %209 = vmatprep.subr.mxu0 0.0
    %210 = vmatpush1.msra.mxu0 0.0
    %211 = vmatprep.subr.mxu0 0.0
    %212 = vmatpush1.msra.mxu0 0.0
    %213 = vmatprep.subr.mxu0 0.0
    %214 = vmatpush1.msra.mxu0 0.0
    %215 = vmatprep.subr.mxu0 0.0
    %216 = vmatpush1.msra.mxu0 0.0
    %217 = vmatprep.subr.mxu0 0.0
    %218 = vmatpush1.msra.mxu0 0.0
    %219 = vmatprep.mubr.f32.mxu0 0.0
    %220 = vmatmul.mubr.f32.gmra.mrb[0].mxu0 %v131
    %v221 = vpop.f32.mrb[0].mxu0
    %v222 = vadd.f32 %v153, %v221
    %v223 = vpop.f32.mrb[0].mxu0
    %224 = vdwg.mxu0
    %v225 = vmax.f32 %v222, 0.0
    %v226 = vld [vmem:[%s5] sm:$0xff]
    %v227 = vld [vmem:[%s5 + $0x8] sm:$0xff]
    %v228 = vld [vmem:[%s5 + $0x10] sm:$0xff]
    %v229 = vld [vmem:[%s5 + $0x18] sm:$0xff]
    %v230 = vld [vmem:[%s5 + $0x20] sm:$0xff]
    %v231 = vld [vmem:[%s5 + $0x28] sm:$0xff]
    %v232 = vld [vmem:[%s5 + $0x30] sm:$0xff]
    %v233 = vld [vmem:[%s5 + $0x38] sm:$0xff]
    %v234 = vld [vmem:[%s5 + $0x40] sm:$0xff]
    %v235 = vld [vmem:[%s5 + $0x48] sm:$0xff]
    %v236 = vld [vmem:[%s5 + $0x50] sm:$0xff]
    %v237 = vld [vmem:[%s5 + $0x58] sm:$0xff]
    %v238 = vld [vmem:[%s5 + $0x60] sm:$0xff]
    %v239 = vld [vmem:[%s5 + $0x68] sm:$0xff]
    %v240 = vld [vmem:[%s5 + $0x70] sm:$0xff]
    %v241 = vld [vmem:[%s5 + $0x78] sm:$0xff]
    %v242 = vld [vmem:[%s6] sm:$0x1]
    %v244 = vlaneseq
    %v245 = vshrl.u32 %v244, 7
    %v246 = vsub.s32 0, %v245
    %v247 = vrot.slane %v242, %v246
    %249 = vmatprep.subr.mxu0 0.0
    %250 = vmatpush1.msra.mxu0 %v226
    %251 = vmatprep.subr.mxu0 0.0
    %252 = vmatpush1.msra.mxu0 %v227
    %253 = vmatprep.subr.mxu0 0.0
    %254 = vmatpush1.msra.mxu0 %v228
    %255 = vmatprep.subr.mxu0 0.0
    %256 = vmatpush1.msra.mxu0 %v229
    %257 = vmatprep.subr.mxu0 0.0
    %258 = vmatpush1.msra.mxu0 %v230
    %259 = vmatprep.subr.mxu0 0.0
    %260 = vmatpush1.msra.mxu0 %v231
    %261 = vmatprep.subr.mxu0 0.0
    %262 = vmatpush1.msra.mxu0 %v232
    %263 = vmatprep.subr.mxu0 0.0
    %264 = vmatpush1.msra.mxu0 %v233
    %265 = vmatprep.subr.mxu0 0.0
    %266 = vmatpush1.msra.mxu0 %v234
    %267 = vmatprep.subr.mxu0 0.0
    %268 = vmatpush1.msra.mxu0 %v235
    %269 = vmatprep.subr.mxu0 0.0
    %270 = vmatpush1.msra.mxu0 %v236
    %271 = vmatprep.subr.mxu0 0.0
    %272 = vmatpush1.msra.mxu0 %v237
    %273 = vmatprep.subr.mxu0 0.0
    %274 = vmatpush1.msra.mxu0 %v238
    %275 = vmatprep.subr.mxu0 0.0
    %276 = vmatpush1.msra.mxu0 %v239
    %277 = vmatprep.subr.mxu0 0.0
    %278 = vmatpush1.msra.mxu0 %v240
    %279 = vmatprep.subr.mxu0 0.0
    %280 = vmatpush1.msra.mxu0 %v241
    %281 = vmatprep.subr.mxu0 0.0
    %282 = vmatpush1.msra.mxu0 0.0
    %283 = vmatprep.subr.mxu0 0.0
    %284 = vmatpush1.msra.mxu0 0.0
    %285 = vmatprep.subr.mxu0 0.0
    %286 = vmatpush1.msra.mxu0 0.0
    %287 = vmatprep.subr.mxu0 0.0
    %288 = vmatpush1.msra.mxu0 0.0
    %289 = vmatprep.subr.mxu0 0.0
    %290 = vmatpush1.msra.mxu0 0.0
    %291 = vmatprep.subr.mxu0 0.0
    %292 = vmatpush1.msra.mxu0 0.0
    %293 = vmatprep.subr.mxu0 0.0
    %294 = vmatpush1.msra.mxu0 0.0
    %295 = vmatprep.subr.mxu0 0.0
    %296 = vmatpush1.msra.mxu0 0.0
    %297 = vmatprep.subr.mxu0 0.0
    %298 = vmatpush1.msra.mxu0 0.0
    %299 = vmatprep.subr.mxu0 0.0
    %300 = vmatpush1.msra.mxu0 0.0
    %301 = vmatprep.subr.mxu0 0.0
    %302 = vmatpush1.msra.mxu0 0.0
    %303 = vmatprep.subr.mxu0 0.0
    %304 = vmatpush1.msra.mxu0 0.0
    %305 = vmatprep.subr.mxu0 0.0
    %306 = vmatpush1.msra.mxu0 0.0
    %307 = vmatprep.subr.mxu0 0.0
    %308 = vmatpush1.msra.mxu0 0.0
    %309 = vmatprep.subr.mxu0 0.0
    %310 = vmatpush1.msra.mxu0 0.0
    %311 = vmatprep.subr.mxu0 0.0
    %312 = vmatpush1.msra.mxu0 0.0
    %313 = vmatprep.mubr.f32.mxu0 0.0
    %314 = vmatmul.mubr.f32.gmra.mrb[0].mxu0 %v225
    %v315 = vpop.f32.mrb[0].mxu0
    %v316 = vadd.f32 %v247, %v315
    %v317 = vpop.f32.mrb[0].mxu0
    %318 = vdwg.mxu0
    %vm319 = vcmask 58368
    %320 = vst.msk [vmem:[#allocation5] sm:$0x3] %vm319, %v316
    // Predicated region
    $region34: #{tpu_custom_call.1} parent=1 // pred_check
      _
    $region35: #{tpu_custom_call.1} parent=1 // pred_check_branch
      %322 = sbr.rel (0) target = $region37
    $region36: #{tpu_custom_call.1} parent=1 // pred_region
      %s324 = ssub.s32 32, 32
      %325 = vsyncadd [#allocation4], %s324
      %s327 = sshll.u32 [#allocation5], 4
      %s328 = int_to_ptr.vmem [resolvable:$true] %s327
      %330 = dma.vmem_to_hbm [thread:$0]  %s328, 32, %s7, [#allocation4]
    $region37: #{tpu_custom_call.1} parent=1 // pred_fallthru
      _
    // Predicated region
    $region38: #{tpu_custom_call.1} parent=1 // pred_check
      _
    $region39: #{tpu_custom_call.1} parent=1 // pred_check_branch
      %332 = sbr.rel (0) target = $region41
    $region40: #{tpu_custom_call.1} parent=1 // pred_region
      %333 = dma.done [#allocation4], 32
    $region41: #{tpu_custom_call.1} parent=1 // pred_fallthru
      _
    %334 = vsyncpa [#allocation3], 1
    %335 = vsyncpa [#allocation4], 1

</llo_original>
